<compile_context>
chip_gen: v6e
topology: v6e:2x2x1
jax: 0.10.0
libtpu: 0.0.40
codegen_flags: <defaults>
</compile_context>

<pallas_src>
import jax
import jax.numpy as jnp
from jax.experimental import pallas as pl
from jax.experimental.pallas import tpu as pltpu

ALPHA = 4
_MAX_INFLIGHT_DMAS = 8  # cap on concurrently outstanding per-frame DMAs


def _slow_indices(T, alpha):
    """torch.linspace(0, T-1, T//alpha).long() via exact integer math."""
    n = T // alpha
    if n <= 0:
        return ()
    if n == 1:
        return (0,)
    return tuple((i * (T - 1)) // (n - 1) for i in range(n))


def _make_gather_kernel(src_indices, max_inflight):
    """Build a kernel copying the listed frames with direct HBM->HBM DMAs."""
    n = len(src_indices)
    k = min(n, max_inflight)

    def kernel(x_hbm, o_hbm, sems):
        # Static Python loop: indices are trace-time constants, so every DMA
        # descriptor has static addresses.  Up to `k` copies are in flight.
        copies = [None] * n
        for j, t_src in enumerate(src_indices):
            if j >= k:
                copies[j - k].wait()  # retire oldest copy, free its sem slot
            cp = pltpu.make_async_copy(
                x_hbm.at[:, pl.ds(t_src, 1), :],
                o_hbm.at[:, pl.ds(j, 1), :],
                sems.at[j % k],
            )
            cp.start()
            copies[j] = cp
        for j in range(max(0, n - k), n):
            copies[j].wait()

    return kernel, k


def _temporal_gather(x3, src_indices):
    """Gather frames along axis 1 of x3 with shape (C, T, D) -> (C, n, D)."""
    C, T, D = x3.shape
    n = len(src_indices)
    kernel, k = _make_gather_kernel(src_indices, _MAX_INFLIGHT_DMAS)
    itemsize = jnp.dtype(x3.dtype).itemsize
    cost = pl.CostEstimate(
        flops=0,
        transcendentals=0,
        bytes_accessed=2 * C * n * D * itemsize,
    )
    return pl.pallas_call(
        kernel,
        out_shape=jax.ShapeDtypeStruct((C, n, D), x3.dtype),
        in_specs=[pl.BlockSpec(memory_space=pl.ANY)],   # raw HBM ref, no auto-DMA
        out_specs=pl.BlockSpec(memory_space=pl.ANY),    # written only via DMA
        scratch_shapes=[pltpu.SemaphoreType.DMA((k,))],
        cost_estimate=cost,
    )(x3)


def pack_pathway(frames, alpha=ALPHA):
    """Returns [slow_pathway, fast_pathway], matching the torch module."""
    C, T, H, W = frames.shape
    idx = _slow_indices(T, alpha)
    n = len(idx)

    if n == 0:
        # T < alpha: empty slow pathway, no kernel launch.
        slow = jnp.zeros((C, 0, H, W), frames.dtype)
        return [slow, frames]

    # Collapse spatial dims: each frame is a single contiguous H*W run per
    # channel -> widest possible DMA bursts, independent of W alignment.
    x3 = frames.reshape(C, T, H * W)
    slow = _temporal_gather(x3, idx).reshape(C, n, H, W)

    # Fast pathway is the identity on the input tensor (alias, no copy).
    fast = frames
    return [slow, fast]


if __name__ == "__main__":
    key = jax.random.PRNGKey(0)
    C, T, H, W = 4, 8, 16, 16  # T divisible by alpha=4 -> 2 slow frames
    frames = jax.random.normal(key, (C, T, H, W), dtype=jnp.float32)

    slow, fast = pack_pathway(frames)
    jax.block_until_ready(slow)
    jax.block_until_ready(fast)

    # Reference check against plain-JAX semantics of the torch module.
    t_slow = T // ALPHA
    ref_idx = jnp.array(_slow_indices(T, ALPHA), dtype=jnp.int32)
    ref_slow = jnp.take(frames, ref_idx, axis=1)
    assert slow.shape == (C, t_slow, H, W)
    assert fast.shape == (C, T, H, W)
    assert jnp.array_equal(slow, ref_slow)
    assert jnp.array_equal(fast, frames)

    print("KERNEL_OK")
</pallas_src>

<mosaic_0001>
module attributes {stable_mosaic.version = 11 : i64} {
  func.func @kernel(%arg0: memref<4x8x256xf32, #tpu.memory_space<any>>, %arg1: memref<4x2x256xf32, #tpu.memory_space<any>>, %arg2: memref<2x!tpu.dma_semaphore, #tpu.memory_space<semaphore_mem>>) attributes {dimension_semantics = [], scalar_prefetch = 0 : i64, scratch_operands = 1 : i64, tpu.core_type = #tpu.core_type<tc>} {
    %c0_i32 = arith.constant 0 : i32
    %c0_i32_0 = arith.constant 0 : i32
    %c0_i32_1 = arith.constant 0 : i32
    %c0_i32_2 = arith.constant 0 : i32
    %0 = tpu.memref_slice %arg0[%c0_i32_0, %c0_i32_1, %c0_i32_2] : memref<4x8x256xf32, #tpu.memory_space<any>> -> memref<4x1x256xf32, #tpu.memory_space<any>>
    %c0_i32_3 = arith.constant 0 : i32
    %c0_i32_4 = arith.constant 0 : i32
    %c0_i32_5 = arith.constant 0 : i32
    %1 = tpu.memref_slice %arg1[%c0_i32_3, %c0_i32_4, %c0_i32_5] : memref<4x2x256xf32, #tpu.memory_space<any>> -> memref<4x1x256xf32, #tpu.memory_space<any>>
    %2 = tpu.memref_slice %arg2[%c0_i32] : memref<2x!tpu.dma_semaphore, #tpu.memory_space<semaphore_mem>> -> memref<1x!tpu.dma_semaphore, #tpu.memory_space<semaphore_mem>>
    %3 = tpu.memref_squeeze %2 : memref<1x!tpu.dma_semaphore, #tpu.memory_space<semaphore_mem>> -> memref<!tpu.dma_semaphore, #tpu.memory_space<semaphore_mem>>
    tpu.enqueue_dma source(%0 : memref<4x1x256xf32, #tpu.memory_space<any>>) target(%1 : memref<4x1x256xf32, #tpu.memory_space<any>>) target_semaphore(%3 : memref<!tpu.dma_semaphore, #tpu.memory_space<semaphore_mem>>)
    %c1_i32 = arith.constant 1 : i32
    %c0_i32_6 = arith.constant 0 : i32
    %c7_i32 = arith.constant 7 : i32
    %c0_i32_7 = arith.constant 0 : i32
    %4 = tpu.memref_slice %arg0[%c0_i32_6, %c7_i32, %c0_i32_7] : memref<4x8x256xf32, #tpu.memory_space<any>> -> memref<4x1x256xf32, #tpu.memory_space<any>>
    %c0_i32_8 = arith.constant 0 : i32
    %c1_i32_9 = arith.constant 1 : i32
    %c0_i32_10 = arith.constant 0 : i32
    %5 = tpu.memref_slice %arg1[%c0_i32_8, %c1_i32_9, %c0_i32_10] : memref<4x2x256xf32, #tpu.memory_space<any>> -> memref<4x1x256xf32, #tpu.memory_space<any>>
    %6 = tpu.memref_slice %arg2[%c1_i32] : memref<2x!tpu.dma_semaphore, #tpu.memory_space<semaphore_mem>> -> memref<1x!tpu.dma_semaphore, #tpu.memory_space<semaphore_mem>>
    %7 = tpu.memref_squeeze %6 : memref<1x!tpu.dma_semaphore, #tpu.memory_space<semaphore_mem>> -> memref<!tpu.dma_semaphore, #tpu.memory_space<semaphore_mem>>
    tpu.enqueue_dma source(%4 : memref<4x1x256xf32, #tpu.memory_space<any>>) target(%5 : memref<4x1x256xf32, #tpu.memory_space<any>>) target_semaphore(%7 : memref<!tpu.dma_semaphore, #tpu.memory_space<semaphore_mem>>)
    %c0_i32_11 = arith.constant 0 : i32
    %c0_i32_12 = arith.constant 0 : i32
    %c0_i32_13 = arith.constant 0 : i32
    %c0_i32_14 = arith.constant 0 : i32
    %8 = tpu.memref_slice %arg0[%c0_i32_12, %c0_i32_13, %c0_i32_14] : memref<4x8x256xf32, #tpu.memory_space<any>> -> memref<4x1x256xf32, #tpu.memory_space<any>>
    %c0_i32_15 = arith.constant 0 : i32
    %c0_i32_16 = arith.constant 0 : i32
    %c0_i32_17 = arith.constant 0 : i32
    %9 = tpu.memref_slice %arg1[%c0_i32_15, %c0_i32_16, %c0_i32_17] : memref<4x2x256xf32, #tpu.memory_space<any>> -> memref<4x1x256xf32, #tpu.memory_space<any>>
    %10 = tpu.memref_slice %arg2[%c0_i32_11] : memref<2x!tpu.dma_semaphore, #tpu.memory_space<semaphore_mem>> -> memref<1x!tpu.dma_semaphore, #tpu.memory_space<semaphore_mem>>
    %11 = tpu.memref_squeeze %10 : memref<1x!tpu.dma_semaphore, #tpu.memory_space<semaphore_mem>> -> memref<!tpu.dma_semaphore, #tpu.memory_space<semaphore_mem>>
    tpu.wait_dma2 semaphore(%11 : memref<!tpu.dma_semaphore, #tpu.memory_space<semaphore_mem>>) src(%8 : memref<4x1x256xf32, #tpu.memory_space<any>>) dst(%9 : memref<4x1x256xf32, #tpu.memory_space<any>>)
    %c1_i32_18 = arith.constant 1 : i32
    %c0_i32_19 = arith.constant 0 : i32
    %c7_i32_20 = arith.constant 7 : i32
    %c0_i32_21 = arith.constant 0 : i32
    %12 = tpu.memref_slice %arg0[%c0_i32_19, %c7_i32_20, %c0_i32_21] : memref<4x8x256xf32, #tpu.memory_space<any>> -> memref<4x1x256xf32, #tpu.memory_space<any>>
    %c0_i32_22 = arith.constant 0 : i32
    %c1_i32_23 = arith.constant 1 : i32
    %c0_i32_24 = arith.constant 0 : i32
    %13 = tpu.memref_slice %arg1[%c0_i32_22, %c1_i32_23, %c0_i32_24] : memref<4x2x256xf32, #tpu.memory_space<any>> -> memref<4x1x256xf32, #tpu.memory_space<any>>
    %14 = tpu.memref_slice %arg2[%c1_i32_18] : memref<2x!tpu.dma_semaphore, #tpu.memory_space<semaphore_mem>> -> memref<1x!tpu.dma_semaphore, #tpu.memory_space<semaphore_mem>>
    %15 = tpu.memref_squeeze %14 : memref<1x!tpu.dma_semaphore, #tpu.memory_space<semaphore_mem>> -> memref<!tpu.dma_semaphore, #tpu.memory_space<semaphore_mem>>
    tpu.wait_dma2 semaphore(%15 : memref<!tpu.dma_semaphore, #tpu.memory_space<semaphore_mem>>) src(%12 : memref<4x1x256xf32, #tpu.memory_space<any>>) dst(%13 : memref<4x1x256xf32, #tpu.memory_space<any>>)
    return
  }
}

</mosaic_0001>

<llo_original>
// kernel: tpu_custom_call.1
$region0: #{tpu_custom_call.1}
  #allocation0 [shape = 'u32[]', space=smem, size = 0x4, offset = 0x4, fixed_abs, tag = 'smem constant byte address 0x4 - core index']
  #allocation1 [shape = 'u32[144,128]{1,0:T(1,128)}', space=vmem, size = 0x12000, scoped, tag = 'internal scratch']
  #allocation2 [shape = 's32[2]{0}', space=sflag, size = 0x8, scoped, tag = 'scratch operand']
  #allocation3 [shape = 's32[]', space=sflag, size = 0x4, offset = 0, fixed_abs, tag = 'sflag constant byte address 0x0 - dummy sync flag']
  #allocation5 [shape = 's32[]', space=sflag, size = 0x4, offset = 0, fixed_abs, tag = 'sflag constant byte address 0x0 - dummy sync flag']
  %s0 = inlined_call_operand.hbm [shape: f32[4,8,256], index: 0, kind: input, shape index: {}]
  %s1 = inlined_call_operand.hbm [shape: f32[4,2,256], index: 1, kind: output, shape index: {}]
  %s2 = sld [smem:[#allocation0]]
  $region2: #{tpu_custom_call.1} parent=0
    _
  %s4 = ssub.s32 1, %s2
  %s5 = scalar_select 0, %s4, %s2
  $region1: #{tpu_custom_call.1} parent=0
    #allocation4 [shape = 'u32[3]{0}', space=smem, size = 0xc, scoped, tag = 'DMA stride descriptor']
    #allocation6 [shape = 'u32[3]{0}', space=smem, size = 0xc, scoped, tag = 'DMA stride descriptor']
    %s7 = sshll.u32 1, 14
    %s8 = sxor.u32 4294967295, %s7
    %12 = sst [smem:[#allocation4]] 128
    %s13 = scalar_lea.smem [#allocation4], 1
    %14 = sst [smem:[%s13]] 32
    %s15 = scalar_lea.smem [#allocation4], 2
    %16 = sst [smem:[%s15]] 1
    %18 = dma.general %s0, 128, %s1, [#allocation2], 131072, [#allocation4], 0, 0
    %s19 = scalar_lea.hbm %s0, 112
    %s20 = scalar_lea.hbm %s1, 16
    %s21 = scalar_lea.sflag [#allocation2], 1
    %s23 = sshll.u32 1, 14
    %s24 = sxor.u32 4294967295, %s23
    %28 = sst [smem:[#allocation6]] 128
    %s29 = scalar_lea.smem [#allocation6], 1
    %30 = sst [smem:[%s29]] 32
    %s31 = scalar_lea.smem [#allocation6], 2
    %32 = sst [smem:[%s31]] 1
    %34 = dma.general %s19, 128, %s20, %s21, 131072, [#allocation6], 0, 0
    %s35 = smul.u32 4, 1
    %s36 = smul.u32 %s35, 2
    %s37 = sshll.u32 %s36, 4
    %38 = dma.done [#allocation2], %s37
    %s39 = sshll.u32 %s36, 4
    %40 = dma.done %s21, %s39
  %41 = vsyncmov [#allocation2]
  %s42 = vpop.sfrf %41
  %p43 = scmp.eq.s32.totalorder %s42, 0
  %p44 = pneg %p43
  %46 = shalt.err (%p44)
  %s47 = scalar_lea.sflag [#allocation2], 1
  %48 = vsyncmov %s47
  %s49 = vpop.sfrf %48
  %p50 = scmp.eq.s32.totalorder %s49, 0
  %p51 = pneg %p50
  %53 = shalt.err (%p51)

</llo_original>
